<compile_context>
chip_gen: v6e
topology: v6e:2x2x1
jax: 0.10.0
libtpu: 0.0.40
codegen_flags: <defaults>
</compile_context>

<pallas_src>
import functools

import jax
import jax.numpy as jnp
from jax.experimental import pallas as pl
from jax.experimental.pallas import tpu as pltpu

LANE = 128             # TPU lane width (last dim)
SUBLANE = 8            # sublane tile height
CHUNK_ROWS = 64        # in-kernel fusion chunk: (64, 128) f32 = 8 vregs/operand
MAX_BLOCK_ROWS = 8192  # (8192, 128) f32 tile = 4 MiB per pipeline buffer
SMALL_MAX_ROWS = 1024  # below this a single un-chunked block handles everything


def _round_up(x, m):
    return ((x + m - 1) // m) * m


def _num_tensorcores():
    """Best-effort count of TensorCores a single Pallas kernel can use."""
    try:
        kind = jax.devices()[0].device_kind.lower()
    except Exception:
        return 2
    # Single-TensorCore chips: v2/v3 cores and the "lite" parts (v5e, v6e).
    if any(s in kind for s in ("lite", "v5e", "v6e", "v2", "v3")):
        return 1
    # v4 / v5p megacore and v7x expose two TensorCores to one kernel.
    return 2


def _wbce_dice_partials_kernel(pred_ref, true_ref, acc_ref, *,
                               w_fire, w_no_fire, rows_total, block_rows,
                               chunk_rows, steps_per_core, unroll):
    """Accumulates per-lane partial sums into this core's (1, 5, 8, 128) block.

    acc layout on axis 1 (restricted to valid, i.e. label != -1, elements):
      [0]=count, [1]=sum(w*bce), [2]=sum(p*t), [3]=sum(p), [4]=sum(t)
    """
    c = pl.program_id(0)            # core-split axis ("parallel")
    i = pl.program_id(1)            # streaming / reduction axis ("arbitrary")

    @pl.when(i == 0)
    def _():
        acc_ref[...] = jnp.zeros_like(acc_ref)

    blk = c * steps_per_core + i    # *unclamped* block id
    row0 = blk * block_rows         # first array row this block covers
    num_chunks = block_rows // chunk_rows

    def fold(x):
        # (chunk_rows, 128) -> (8, 128): pure vreg adds; the cross-lane
        # reduction is deferred to the tiny JAX combine outside the kernel.
        return jnp.sum(x.reshape(-1, SUBLANE, LANE), axis=0)

    def accumulate(row_limit):
        """Add this block's partial sums.  row_limit=None => every row valid."""

        def process(p_raw, t_raw, r0, carry):
            cnt, bce, inter, psum, tsum = carry
            p = p_raw.astype(jnp.float32)
            t = t_raw.astype(jnp.float32)
            if row_limit is not None:
                # Rows past the end of the real array (partial last block)
                # hold garbage: sanitise so nothing (incl. NaNs) leaks through.
                r_idx = r0 + jax.lax.broadcasted_iota(jnp.int32, p.shape, 0)
                in_range = r_idx < row_limit
                p = jnp.where(in_range, p, 0.5)
                t = jnp.where(in_range, t, -1.0)
            is_fire = t == 1.0
            validf = (t != -1.0).astype(jnp.float32)
            # Weighted BCE with PyTorch's -100 log clamp.
            # NOTE: the single-log form assumes hard labels {0, 1} on valid
            # pixels (true for NDWS fire masks); there it equals
            # -(t*log(p) + (1-t)*log(1-p)).
            w = jnp.where(is_fire, w_fire, w_no_fire) * validf   # 0 on invalid
            log_term = jnp.maximum(jnp.log(jnp.where(is_fire, p, 1.0 - p)),
                                   -100.0)
            pm = p * validf
            tm = t * validf
            return (cnt + fold(validf),
                    bce - fold(w * log_term),
                    inter + fold(pm * tm),
                    psum + fold(pm),
                    tsum + fold(tm))

        zero = jnp.zeros((SUBLANE, LANE), jnp.float32)
        carry = (zero, zero, zero, zero, zero)
        if num_chunks == 1:
            carry = process(pred_ref[...], true_ref[...], 0, carry)
        else:
            def chunk_fn(j, carry):
                r0 = pl.multiple_of(j * chunk_rows, chunk_rows)
                return process(pred_ref[pl.ds(r0, chunk_rows), :],
                               true_ref[pl.ds(r0, chunk_rows), :], r0, carry)
            carry = jax.lax.fori_loop(0, num_chunks, chunk_fn, carry,
                                      unroll=unroll)

        cnt, bce, inter, psum, tsum = carry
        acc_ref[0, 0] += cnt
        acc_ref[0, 1] += bce
        acc_ref[0, 2] += inter
        acc_ref[0, 3] += psum
        acc_ref[0, 4] += tsum

    if rows_total % block_rows == 0:
        # Every in-range block is full: single mask-free fast path; clamped
        # duplicate tiles (blk >= n_blocks) are skipped.
        @pl.when(row0 < rows_total)
        def _():
            accumulate(None)
    else:
        @pl.when(row0 + block_rows <= rows_total)
        def _():
            accumulate(None)                      # full block, no masking

        @pl.when(jnp.logical_and(row0 < rows_total,
                                 row0 + block_rows > rows_total))
        def _():
            accumulate(rows_total - row0)         # the one partial last block


def custom_wbce_dice_loss(y_pred, y_true, w_fire=10.0, w_no_fire=1.0,
                          dice_weight=2.0):
    p = jnp.ravel(y_pred)   # keep native dtype; cast to f32 inside the kernel
    t = jnp.ravel(y_true)
    n = p.shape[0]
    if n == 0:
        return jnp.array(0.0, jnp.float32)

    rows = pl.cdiv(n, LANE)
    if rows <= SMALL_MAX_ROWS:
        # Small problem: one (rows8, 128) block, single grid step, no chunking.
        rows_pad = _round_up(rows, SUBLANE)
        block_rows = rows_pad
        chunk_rows = rows_pad
        n_blocks = 1
        num_split = 1
    else:
        # Large problem: only the ragged lane tail is ever padded; the partial
        # last block (if any) is handled inside the kernel.
        rows_pad = rows
        block_rows = min(MAX_BLOCK_ROWS, (rows // CHUNK_ROWS) * CHUNK_ROWS)
        chunk_rows = CHUNK_ROWS
        n_blocks = pl.cdiv(rows, block_rows)
        num_split = 1 if n_blocks == 1 else _num_tensorcores()

    n_pad = rows_pad * LANE
    if n_pad != n:
        # Pad the tail: label -1.0 marks padding invalid (exactly the module's
        # own mask); prediction 0.5 keeps log() finite.
        p = jnp.pad(p, (0, n_pad - n), constant_values=0.5)
        t = jnp.pad(t, (0, n_pad - n), constant_values=-1)
    p2 = p.reshape(rows_pad, LANE)
    t2 = t.reshape(rows_pad, LANE)

    steps_per_core = pl.cdiv(n_blocks, num_split)

    def in_map(c, i):
        # Clamp so the DMA never walks past the array; clamped duplicate /
        # out-of-range tiles are skipped inside the kernel via pl.when.
        return (jnp.minimum(c * steps_per_core + i, n_blocks - 1), 0)

    kernel = functools.partial(
        _wbce_dice_partials_kernel,
        w_fire=float(w_fire), w_no_fire=float(w_no_fire),
        rows_total=rows_pad, block_rows=block_rows, chunk_rows=chunk_rows,
        steps_per_core=steps_per_core, unroll=4)

    partials = pl.pallas_call(
        kernel,
        out_shape=jax.ShapeDtypeStruct((num_split, 5, SUBLANE, LANE),
                                       jnp.float32),
        grid_spec=pl.GridSpec(
            grid=(num_split, steps_per_core),
            in_specs=[pl.BlockSpec((block_rows, LANE), in_map),
                      pl.BlockSpec((block_rows, LANE), in_map)],
            out_specs=pl.BlockSpec((1, 5, SUBLANE, LANE),
                                   lambda c, i: (c, 0, 0, 0)),
        ),
        compiler_params=pltpu.CompilerParams(
            dimension_semantics=("parallel", "arbitrary"),
            vmem_limit_bytes=40 * 1024 * 1024),
    )(p2, t2)

    # Tiny final combine in plain JAX (5 scalars).
    sums = jnp.sum(partials, axis=(0, 2, 3))
    count, bce_sum, inter, p_sum, t_sum = (sums[k] for k in range(5))
    wbce = bce_sum / jnp.maximum(count, 1.0)
    dice = 1.0 - (2.0 * inter + 1e-6) / (p_sum + t_sum + 1e-6)
    total = wbce + dice_weight * dice
    # "if not valid_mask.any(): return 0.0"
    return jnp.where(count > 0.0, total, jnp.zeros_like(total))


def _reference_loss(y_pred, y_true, w_fire=10.0, w_no_fire=1.0,
                    dice_weight=2.0):
    """Pure-JAX reference matching the PyTorch forward (general two-log BCE)."""
    p = jnp.ravel(y_pred).astype(jnp.float32)
    t = jnp.ravel(y_true).astype(jnp.float32)
    valid = t != -1.0
    w = jnp.where(t == 1.0, w_fire, w_no_fire)
    bce = -w * (t * jnp.maximum(jnp.log(p), -100.0)
                + (1.0 - t) * jnp.maximum(jnp.log(1.0 - p), -100.0))
    count = jnp.sum(valid.astype(jnp.float32))
    wbce = jnp.sum(jnp.where(valid, bce, 0.0)) / jnp.maximum(count, 1.0)
    inter = jnp.sum(jnp.where(valid, p * t, 0.0))
    dice = 1.0 - (2.0 * inter + 1e-6) / (
        jnp.sum(jnp.where(valid, p, 0.0)) + jnp.sum(jnp.where(valid, t, 0.0))
        + 1e-6)
    return jnp.where(count > 0.0, wbce + dice_weight * dice, 0.0)


if __name__ == "__main__":
    key = jax.random.PRNGKey(0)

    def make_inputs(shape, k):
        k_pred, k_true = jax.random.split(k)
        y_pred = jax.nn.sigmoid(jax.random.normal(k_pred, shape, jnp.float32))
        y_true = jax.random.randint(k_true, shape, -1, 2).astype(jnp.float32)
        return y_pred, y_true

    k1, k2 = jax.random.split(key)

    # Small (B, C, H, W) shape consistent with the module's usage.
    y_pred, y_true = make_inputs((2, 4, 16, 16), k1)
    loss = jax.block_until_ready(custom_wbce_dice_loss(y_pred, y_true))
    ref = jax.block_until_ready(_reference_loss(y_pred, y_true))
    assert jnp.allclose(loss, ref, rtol=1e-5, atol=1e-5), (loss, ref)

    # Larger ragged shape exercising the streaming path (lane-tail padding,
    # multiple blocks, partial last block, core split / skipped duplicate).
    y_pred2, y_true2 = make_inputs((16, 4, 181, 183), k2)
    loss2 = jax.block_until_ready(custom_wbce_dice_loss(y_pred2, y_true2))
    ref2 = jax.block_until_ready(_reference_loss(y_pred2, y_true2))
    assert jnp.allclose(loss2, ref2, rtol=1e-3, atol=1e-3), (loss2, ref2)

    print("KERNEL_OK")
</pallas_src>

<mosaic_0001>
module attributes {stable_mosaic.version = 11 : i64} {
  func.func @_wbce_dice_partials_kernel(%arg0: i32, %arg1: i32, %arg2: memref<16x128xf32, #tpu.memory_space<vmem>>, %arg3: memref<16x128xf32, #tpu.memory_space<vmem>>, %arg4: memref<1x5x8x128xf32, #tpu.memory_space<vmem>>) attributes {dimension_semantics = [#tpu.dimension_semantics<parallel>, #tpu.dimension_semantics<arbitrary>], iteration_bounds = array<i64: 1, 1>, scalar_prefetch = 0 : i64, scratch_operands = 0 : i64, tpu.core_type = #tpu.core_type<tc>, window_params = [{transform_indices = @transform_0, window_bounds = array<i64: 16, 128>}, {transform_indices = @transform_1, window_bounds = array<i64: 16, 128>}, {transform_indices = @transform_2, window_bounds = array<i64: 1, 5, 8, 128>}]} {
    %c0_i32 = arith.constant 0 : i32
    %0 = arith.cmpi eq, %arg1, %c0_i32 : i32
    %1 = arith.extui %0 : i1 to i32
    %c0_i32_0 = arith.constant 0 : i32
    %2 = arith.cmpi ne, %1, %c0_i32_0 : i32
    scf.if %2 {
      %cst = arith.constant 0.000000e+00 : f32
      %9 = vector.broadcast %cst : f32 to vector<1x5x8x128xf32>
      %c0 = arith.constant 0 : index
      %c0_3 = arith.constant 0 : index
      %c0_4 = arith.constant 0 : index
      %c0_5 = arith.constant 0 : index
      %10 = vector.load %arg4[%c0, %c0_3, %c0_4, %c0_5] : memref<1x5x8x128xf32, #tpu.memory_space<vmem>>, vector<1x5x8x128xf32>
      tpu.vector_store %arg4[%c0, %c0_3, %c0_4, %c0_5], %9 {strides = array<i32>} : memref<1x5x8x128xf32, #tpu.memory_space<vmem>>, vector<1x5x8x128xf32>,
    } else {
    }
    %c1_i32 = arith.constant 1 : i32
    %3 = arith.muli %arg0, %c1_i32 : i32
    %4 = arith.addi %3, %arg1 : i32
    %c16_i32 = arith.constant 16 : i32
    %5 = arith.muli %4, %c16_i32 : i32
    %c16_i32_1 = arith.constant 16 : i32
    %6 = arith.cmpi slt, %5, %c16_i32_1 : i32
    %7 = arith.extui %6 : i1 to i32
    %c0_i32_2 = arith.constant 0 : i32
    %8 = arith.cmpi ne, %7, %c0_i32_2 : i32
    scf.if %8 {
      %cst = arith.constant 0.000000e+00 : f32
      %9 = vector.broadcast %cst : f32 to vector<8x128xf32>
      %c0 = arith.constant 0 : index
      %c0_3 = arith.constant 0 : index
      %10 = vector.load %arg2[%c0, %c0_3] : memref<16x128xf32, #tpu.memory_space<vmem>>, vector<16x128xf32>
      %c0_4 = arith.constant 0 : index
      %c0_5 = arith.constant 0 : index
      %11 = vector.load %arg3[%c0_4, %c0_5] : memref<16x128xf32, #tpu.memory_space<vmem>>, vector<16x128xf32>
      %cst_6 = arith.constant 1.000000e+00 : f32
      %12 = vector.broadcast %cst_6 : f32 to vector<16x128xf32>
      %13 = arith.cmpf oeq, %11, %12 : vector<16x128xf32>
      %cst_7 = arith.constant -1.000000e+00 : f32
      %14 = vector.broadcast %cst_7 : f32 to vector<16x128xf32>
      %15 = arith.cmpf one, %11, %14 : vector<16x128xf32>
      %16 = arith.extui %15 : vector<16x128xi1> to vector<16x128xi32>
      %17 = arith.sitofp %16 : vector<16x128xi32> to vector<16x128xf32>
      %cst_8 = arith.constant 1.000000e+01 : f32
      %cst_9 = arith.constant 1.000000e+00 : f32
      %18 = vector.broadcast %cst_8 : f32 to vector<16x128xf32>
      %19 = vector.broadcast %cst_9 : f32 to vector<16x128xf32>
      %20 = arith.select %13, %18, %19 : vector<16x128xi1>, vector<16x128xf32>
      %21 = arith.mulf %20, %17 : vector<16x128xf32>
      %cst_10 = arith.constant 1.000000e+00 : f32
      %22 = vector.broadcast %cst_10 : f32 to vector<16x128xf32>
      %23 = arith.subf %22, %10 : vector<16x128xf32>
      %24 = arith.select %13, %10, %23 : vector<16x128xi1>, vector<16x128xf32>
      %25 = math.log %24 : vector<16x128xf32>
      %cst_11 = arith.constant -1.000000e+02 : f32
      %26 = vector.broadcast %cst_11 : f32 to vector<16x128xf32>
      %27 = arith.maximumf %25, %26 : vector<16x128xf32>
      %28 = arith.mulf %10, %17 : vector<16x128xf32>
      %29 = arith.mulf %11, %17 : vector<16x128xf32>
      %30 = vector.shape_cast %17 : vector<16x128xf32> to vector<2x8x128xf32>
      %cst_12 = arith.constant dense<0.000000e+00> : vector<8x128xf32>
      %31 = vector.multi_reduction <add>, %30, %cst_12 [0] : vector<2x8x128xf32> to vector<8x128xf32>
      %32 = arith.addf %9, %31 : vector<8x128xf32>
      %33 = arith.mulf %21, %27 : vector<16x128xf32>
      %34 = vector.shape_cast %33 : vector<16x128xf32> to vector<2x8x128xf32>
      %cst_13 = arith.constant dense<0.000000e+00> : vector<8x128xf32>
      %35 = vector.multi_reduction <add>, %34, %cst_13 [0] : vector<2x8x128xf32> to vector<8x128xf32>
      %36 = arith.subf %9, %35 : vector<8x128xf32>
      %37 = arith.mulf %28, %29 : vector<16x128xf32>
      %38 = vector.shape_cast %37 : vector<16x128xf32> to vector<2x8x128xf32>
      %cst_14 = arith.constant dense<0.000000e+00> : vector<8x128xf32>
      %39 = vector.multi_reduction <add>, %38, %cst_14 [0] : vector<2x8x128xf32> to vector<8x128xf32>
      %40 = arith.addf %9, %39 : vector<8x128xf32>
      %41 = vector.shape_cast %28 : vector<16x128xf32> to vector<2x8x128xf32>
      %cst_15 = arith.constant dense<0.000000e+00> : vector<8x128xf32>
      %42 = vector.multi_reduction <add>, %41, %cst_15 [0] : vector<2x8x128xf32> to vector<8x128xf32>
      %43 = arith.addf %9, %42 : vector<8x128xf32>
      %44 = vector.shape_cast %29 : vector<16x128xf32> to vector<2x8x128xf32>
      %cst_16 = arith.constant dense<0.000000e+00> : vector<8x128xf32>
      %45 = vector.multi_reduction <add>, %44, %cst_16 [0] : vector<2x8x128xf32> to vector<8x128xf32>
      %46 = arith.addf %9, %45 : vector<8x128xf32>
      %c0_17 = arith.constant 0 : index
      %c0_18 = arith.constant 0 : index
      %c0_19 = arith.constant 0 : index
      %c0_20 = arith.constant 0 : index
      %47 = vector.load %arg4[%c0_17, %c0_18, %c0_19, %c0_20] : memref<1x5x8x128xf32, #tpu.memory_space<vmem>>, vector<1x1x8x128xf32>
      %48 = vector.shape_cast %47 : vector<1x1x8x128xf32> to vector<8x128xf32>
      %49 = arith.addf %48, %32 : vector<8x128xf32>
      %c0_21 = arith.constant 0 : index
      %c0_22 = arith.constant 0 : index
      %c0_23 = arith.constant 0 : index
      %c0_24 = arith.constant 0 : index
      %50 = vector.load %arg4[%c0_21, %c0_22, %c0_23, %c0_24] : memref<1x5x8x128xf32, #tpu.memory_space<vmem>>, vector<1x1x8x128xf32>
      %51 = vector.shape_cast %50 : vector<1x1x8x128xf32> to vector<8x128xf32>
      %52 = vector.shape_cast %49 : vector<8x128xf32> to vector<1x1x8x128xf32>
      tpu.vector_store %arg4[%c0_21, %c0_22, %c0_23, %c0_24], %52 {strides = array<i32>} : memref<1x5x8x128xf32, #tpu.memory_space<vmem>>, vector<1x1x8x128xf32>,
      %c0_25 = arith.constant 0 : index
      %c1 = arith.constant 1 : index
      %c0_26 = arith.constant 0 : index
      %c0_27 = arith.constant 0 : index
      %53 = vector.load %arg4[%c0_25, %c1, %c0_26, %c0_27] : memref<1x5x8x128xf32, #tpu.memory_space<vmem>>, vector<1x1x8x128xf32>
      %54 = vector.shape_cast %53 : vector<1x1x8x128xf32> to vector<8x128xf32>
      %55 = arith.addf %54, %36 : vector<8x128xf32>
      %c0_28 = arith.constant 0 : index
      %c1_29 = arith.constant 1 : index
      %c0_30 = arith.constant 0 : index
      %c0_31 = arith.constant 0 : index
      %56 = vector.load %arg4[%c0_28, %c1_29, %c0_30, %c0_31] : memref<1x5x8x128xf32, #tpu.memory_space<vmem>>, vector<1x1x8x128xf32>
      %57 = vector.shape_cast %56 : vector<1x1x8x128xf32> to vector<8x128xf32>
      %58 = vector.shape_cast %55 : vector<8x128xf32> to vector<1x1x8x128xf32>
      tpu.vector_store %arg4[%c0_28, %c1_29, %c0_30, %c0_31], %58 {strides = array<i32>} : memref<1x5x8x128xf32, #tpu.memory_space<vmem>>, vector<1x1x8x128xf32>,
      %c0_32 = arith.constant 0 : index
      %c2 = arith.constant 2 : index
      %c0_33 = arith.constant 0 : index
      %c0_34 = arith.constant 0 : index
      %59 = vector.load %arg4[%c0_32, %c2, %c0_33, %c0_34] : memref<1x5x8x128xf32, #tpu.memory_space<vmem>>, vector<1x1x8x128xf32>
      %60 = vector.shape_cast %59 : vector<1x1x8x128xf32> to vector<8x128xf32>
      %61 = arith.addf %60, %40 : vector<8x128xf32>
      %c0_35 = arith.constant 0 : index
      %c2_36 = arith.constant 2 : index
      %c0_37 = arith.constant 0 : index
      %c0_38 = arith.constant 0 : index
      %62 = vector.load %arg4[%c0_35, %c2_36, %c0_37, %c0_38] : memref<1x5x8x128xf32, #tpu.memory_space<vmem>>, vector<1x1x8x128xf32>
      %63 = vector.shape_cast %62 : vector<1x1x8x128xf32> to vector<8x128xf32>
      %64 = vector.shape_cast %61 : vector<8x128xf32> to vector<1x1x8x128xf32>
      tpu.vector_store %arg4[%c0_35, %c2_36, %c0_37, %c0_38], %64 {strides = array<i32>} : memref<1x5x8x128xf32, #tpu.memory_space<vmem>>, vector<1x1x8x128xf32>,
      %c0_39 = arith.constant 0 : index
      %c3 = arith.constant 3 : index
      %c0_40 = arith.constant 0 : index
      %c0_41 = arith.constant 0 : index
      %65 = vector.load %arg4[%c0_39, %c3, %c0_40, %c0_41] : memref<1x5x8x128xf32, #tpu.memory_space<vmem>>, vector<1x1x8x128xf32>
      %66 = vector.shape_cast %65 : vector<1x1x8x128xf32> to vector<8x128xf32>
      %67 = arith.addf %66, %43 : vector<8x128xf32>
      %c0_42 = arith.constant 0 : index
      %c3_43 = arith.constant 3 : index
      %c0_44 = arith.constant 0 : index
      %c0_45 = arith.constant 0 : index
      %68 = vector.load %arg4[%c0_42, %c3_43, %c0_44, %c0_45] : memref<1x5x8x128xf32, #tpu.memory_space<vmem>>, vector<1x1x8x128xf32>
      %69 = vector.shape_cast %68 : vector<1x1x8x128xf32> to vector<8x128xf32>
      %70 = vector.shape_cast %67 : vector<8x128xf32> to vector<1x1x8x128xf32>
      tpu.vector_store %arg4[%c0_42, %c3_43, %c0_44, %c0_45], %70 {strides = array<i32>} : memref<1x5x8x128xf32, #tpu.memory_space<vmem>>, vector<1x1x8x128xf32>,
      %c0_46 = arith.constant 0 : index
      %c4 = arith.constant 4 : index
      %c0_47 = arith.constant 0 : index
      %c0_48 = arith.constant 0 : index
      %71 = vector.load %arg4[%c0_46, %c4, %c0_47, %c0_48] : memref<1x5x8x128xf32, #tpu.memory_space<vmem>>, vector<1x1x8x128xf32>
      %72 = vector.shape_cast %71 : vector<1x1x8x128xf32> to vector<8x128xf32>
      %73 = arith.addf %72, %46 : vector<8x128xf32>
      %c0_49 = arith.constant 0 : index
      %c4_50 = arith.constant 4 : index
      %c0_51 = arith.constant 0 : index
      %c0_52 = arith.constant 0 : index
      %74 = vector.load %arg4[%c0_49, %c4_50, %c0_51, %c0_52] : memref<1x5x8x128xf32, #tpu.memory_space<vmem>>, vector<1x1x8x128xf32>
      %75 = vector.shape_cast %74 : vector<1x1x8x128xf32> to vector<8x128xf32>
      %76 = vector.shape_cast %73 : vector<8x128xf32> to vector<1x1x8x128xf32>
      tpu.vector_store %arg4[%c0_49, %c4_50, %c0_51, %c0_52], %76 {strides = array<i32>} : memref<1x5x8x128xf32, #tpu.memory_space<vmem>>, vector<1x1x8x128xf32>,
    } else {
    }
    return
  }
  func.func @transform_0(%arg0: i32, %arg1: i32) -> (i32, i32) {
    %c1_i32 = arith.constant 1 : i32
    %0 = arith.muli %arg0, %c1_i32 : i32
    %1 = arith.addi %0, %arg1 : i32
    %c0_i32 = arith.constant 0 : i32
    %2 = arith.minsi %1, %c0_i32 : i32
    %c0_i32_0 = arith.constant 0 : i32
    %c0_i32_1 = arith.constant 0 : i32
    return %2, %c0_i32_0 : i32, i32
  }
  func.func @transform_1(%arg0: i32, %arg1: i32) -> (i32, i32) {
    %c1_i32 = arith.constant 1 : i32
    %0 = arith.muli %arg0, %c1_i32 : i32
    %1 = arith.addi %0, %arg1 : i32
    %c0_i32 = arith.constant 0 : i32
    %2 = arith.minsi %1, %c0_i32 : i32
    %c0_i32_0 = arith.constant 0 : i32
    %c0_i32_1 = arith.constant 0 : i32
    return %2, %c0_i32_0 : i32, i32
  }
  func.func @transform_2(%arg0: i32, %arg1: i32) -> (i32, i32, i32, i32) {
    %c0_i32 = arith.constant 0 : i32
    %c0_i32_0 = arith.constant 0 : i32
    %c0_i32_1 = arith.constant 0 : i32
    %c0_i32_2 = arith.constant 0 : i32
    return %arg0, %c0_i32, %c0_i32_0, %c0_i32_1 : i32, i32, i32, i32
  }
}

</mosaic_0001>

<llo_original>
// kernel: tpu_custom_call.1
$region0: #{tpu_custom_call.1}
  #allocation0 [shape = 'u32[]', space=smem, size = 0x4, offset = 0x4, fixed_abs, tag = 'smem constant byte address 0x4 - core index']
  #allocation1 [shape = 'u32[144,128]{1,0:T(1,128)}', space=vmem, size = 0x12000, scoped, tag = 'internal scratch']
  %s0 = inlined_call_operand.hbm [shape: f32[16,128], index: 0, kind: input, shape index: {}]
  %s1 = inlined_call_operand.hbm [shape: f32[16,128], index: 1, kind: input, shape index: {}]
  %s2 = inlined_call_operand.hbm [shape: f32[1,5,8,128], index: 2, kind: output, shape index: {}]
  %s3 = sld [smem:[#allocation0]]
  $region34: #{tpu_custom_call.1} parent=0
    _
  %s5 = ssub.s32 1, %s3
  %s6 = scalar_select 0, %s5, %s3
  $region1: #{tpu_custom_call.1} parent=0
    #allocation2 [shape = 'u8[8192]{0}', space=vmem, size = 0x2000, scoped, tag = 'input window, operand 0, single buffered']
    #allocation3 [shape = 's32[1]{0}', space=sflag, size = 0x4, scoped, tag = 'scoped memory for tpu_custom_call.1']
    #allocation4 [shape = 's32[1]{0}', space=sflag, size = 0x4, scoped, tag = 'scoped memory for tpu_custom_call.1']
    #allocation5 [shape = 'u8[8192]{0}', space=vmem, size = 0x2000, scoped, tag = 'input window, operand 1, single buffered']
    #allocation6 [shape = 's32[1]{0}', space=sflag, size = 0x4, scoped, tag = 'scoped memory for tpu_custom_call.1']
    #allocation7 [shape = 'u8[20480]{0}', space=vmem, size = 0x5000, scoped, tag = 'output window, operand 0, single buffered']
    %7 = vsyncpa [#allocation3], 0
    %8 = vsyncpa [#allocation6], 0
    %9 = vsyncpa [#allocation4], 0
    // Predicated region
    $region2: #{tpu_custom_call.1} parent=1 // pred_check
      _
    $region3: #{tpu_custom_call.1} parent=1 // pred_check_branch
      %11 = sbr.rel (0) target = $region5
    $region4: #{tpu_custom_call.1} parent=1 // pred_region
      %s12 = sadd.s32 0, 0
      %p13 = scmp.lt.s32.totalorder %s12, 0
      %s14 = scalar_select %p13, %s12, 0
      %s15 = smul.u32 2, %s14
      %s17 = ssub.s32 256, 256
      %18 = vsyncadd [#allocation3], %s17
      %s19 = smul.addr %s15, 128
      %s20 = scalar_lea.hbm %s0, %s19
      %s21 = sshll.u32 [#allocation2], 4
      %s22 = int_to_ptr.vmem [resolvable:$true] %s21
      %27 = dma.hbm_to_vmem [thread:$0]  %s20, 256, %s22, [#allocation3], 128, 128, 8
    $region5: #{tpu_custom_call.1} parent=1 // pred_fallthru
      _
    // Predicated region
    $region6: #{tpu_custom_call.1} parent=1 // pred_check
      _
    $region7: #{tpu_custom_call.1} parent=1 // pred_check_branch
      %29 = sbr.rel (0) target = $region9
    $region8: #{tpu_custom_call.1} parent=1 // pred_region
      %s30 = sadd.s32 0, 0
      %p31 = scmp.lt.s32.totalorder %s30, 0
      %s32 = scalar_select %p31, %s30, 0
      %s33 = smul.u32 2, %s32
      %s35 = ssub.s32 256, 256
      %36 = vsyncadd [#allocation6], %s35
      %s37 = smul.addr %s33, 128
      %s38 = scalar_lea.hbm %s1, %s37
      %s39 = sshll.u32 [#allocation5], 4
      %s40 = int_to_ptr.vmem [resolvable:$true] %s39
      %45 = dma.hbm_to_vmem [thread:$0]  %s38, 256, %s40, [#allocation6], 128, 128, 8
    $region9: #{tpu_custom_call.1} parent=1 // pred_fallthru
      _
    // Predicated region
    $region10: #{tpu_custom_call.1} parent=1 // pred_check
      _
    $region11: #{tpu_custom_call.1} parent=1 // pred_check_branch
      %47 = sbr.rel (0) target = $region13
    $region12: #{tpu_custom_call.1} parent=1 // pred_region
      %48 = dma.done [#allocation3], 256
    $region13: #{tpu_custom_call.1} parent=1 // pred_fallthru
      _
    // Predicated region
    $region14: #{tpu_custom_call.1} parent=1 // pred_check
      _
    $region15: #{tpu_custom_call.1} parent=1 // pred_check_branch
      %50 = sbr.rel (0) target = $region17
    $region16: #{tpu_custom_call.1} parent=1 // pred_region
      %51 = dma.done [#allocation6], 256
    $region17: #{tpu_custom_call.1} parent=1 // pred_fallthru
      _
    %s52 = sadd.s32 0, 0
    %p53 = scmp.lt.s32.totalorder %s52, 0
    %s54 = scalar_select %p53, %s52, 0
    %s55 = smul.u32 2, %s54
    %s56 = sadd.s32 0, 0
    %p57 = scmp.lt.s32.totalorder %s56, 0
    %s58 = scalar_select %p57, %s56, 0
    %s59 = smul.u32 2, %s58
    %p60 = scmp.eq.s32.totalorder 0, 0
    // Predicated region
    $region18: #{tpu_custom_call.1} parent=1 // pred_check
      %p61 = pneg %p60
    $region19: #{tpu_custom_call.1} parent=1 // pred_check_branch
      %63 = sbr.rel (%p61) target = $region21
    $region20: #{tpu_custom_call.1} parent=1 // pred_region
      %64 = vst [vmem:[#allocation7] sm:$0xff] 0.0
      %65 = vst [vmem:[#allocation7 + $0x8] sm:$0xff] 0.0
      %66 = vst [vmem:[#allocation7 + $0x10] sm:$0xff] 0.0
      %67 = vst [vmem:[#allocation7 + $0x18] sm:$0xff] 0.0
      %68 = vst [vmem:[#allocation7 + $0x20] sm:$0xff] 0.0
    $region21: #{tpu_custom_call.1} parent=1 // pred_fallthru
      _
    %s69 = sadd.s32 0, 0
    %s70 = smul.u32 %s69, 16
    %p71 = scmp.lt.s32.totalorder %s70, 16
    // Predicated region
    $region22: #{tpu_custom_call.1} parent=1 // pred_check
      %p72 = pneg %p71
    $region23: #{tpu_custom_call.1} parent=1 // pred_check_branch
      %74 = sbr.rel (%p72) target = $region25
    $region24: #{tpu_custom_call.1} parent=1 // pred_region
      %v75 = vld [vmem:[#allocation2] sm:$0xff]
      %v76 = vld [vmem:[#allocation2 + $0x8] sm:$0xff]
      %v77 = vld [vmem:[#allocation5] sm:$0xff]
      %v78 = vld [vmem:[#allocation5 + $0x8] sm:$0xff]
      %vm79 = vcmp.eq.f32.partialorder %v77, 1.0
      %vm80 = vcmp.eq.f32.partialorder %v78, 1.0
      %vm81 = vcmp.ne.f32.partialorder %v77, -1.0
      %vm82 = vcmp.ne.f32.partialorder %v78, -1.0
      %v83 = vsel %vm81, 1, 0
      %v84 = vsel %vm82, 1, 0
      %v85 = vcvt.s32.f32 %v83
      %v86 = vcvt.s32.f32 %v84
      %v87 = vsel %vm79, 10.0, 1.0
      %v88 = vsel %vm80, 10.0, 1.0
      %v89 = vmul.f32 %v87, %v85
      %v90 = vmul.f32 %v88, %v86
      %v91 = vsub.f32 1.0, %v75
      %v92 = vsub.f32 1.0, %v76
      %v93 = vsel %vm79, %v75, %v91
      %v94 = vsel %vm80, %v76, %v92
      %v95 = vlog2.pop %v93
      %v96 = vmul.f32 %v95, 0.6931472
      %v97 = vlog2.pop %v94
      %v98 = vmul.f32 %v97, 0.6931472
      %v99 = vmax.f32 %v96, -100.0
      %v100 = vmax.f32 %v98, -100.0
      %v101 = vmul.f32 %v75, %v85
      %v102 = vmul.f32 %v76, %v86
      %v103 = vmul.f32 %v77, %v85
      %v104 = vmul.f32 %v78, %v86
      %v105 = vadd.f32 %v85, %v86
      %v106 = vadd.f32 %v105, 0.0
      %v107 = vmul.f32 %v89, %v99
      %v108 = vmul.f32 %v90, %v100
      %v109 = vadd.f32 %v107, %v108
      %v110 = vsub.f32 0.0, %v109
      %v111 = vmul.f32 %v101, %v103
      %v112 = vmul.f32 %v102, %v104
      %v113 = vadd.f32 %v111, %v112
      %v114 = vadd.f32 %v113, 0.0
      %v115 = vadd.f32 %v101, %v102
      %v116 = vadd.f32 %v115, 0.0
      %v117 = vadd.f32 %v103, %v104
      %v118 = vadd.f32 %v117, 0.0
      %v119 = vld [vmem:[#allocation7] sm:$0xff]
      %v120 = vadd.f32 %v119, %v106
      %121 = vst [vmem:[#allocation7] sm:$0xff] %v120
      %s122 = scalar_lea.vmem [#allocation7], 8
      %v123 = vld [vmem:[%s122] sm:$0xff]
      %v124 = vadd.f32 %v123, %v110
      %125 = vst [vmem:[%s122] sm:$0xff] %v124
      %s126 = scalar_lea.vmem [#allocation7], 16
      %v127 = vld [vmem:[%s126] sm:$0xff]
      %v128 = vadd.f32 %v127, %v114
      %129 = vst [vmem:[%s126] sm:$0xff] %v128
      %s130 = scalar_lea.vmem [#allocation7], 24
      %v131 = vld [vmem:[%s130] sm:$0xff]
      %v132 = vadd.f32 %v131, %v116
      %133 = vst [vmem:[%s130] sm:$0xff] %v132
      %s134 = scalar_lea.vmem [#allocation7], 32
      %v135 = vld [vmem:[%s134] sm:$0xff]
      %v136 = vadd.f32 %v135, %v118
      %137 = vst [vmem:[%s134] sm:$0xff] %v136
    $region25: #{tpu_custom_call.1} parent=1 // pred_fallthru
      _
    // Predicated region
    $region26: #{tpu_custom_call.1} parent=1 // pred_check
      _
    $region27: #{tpu_custom_call.1} parent=1 // pred_check_branch
      %139 = sbr.rel (0) target = $region29
    $region28: #{tpu_custom_call.1} parent=1 // pred_region
      %s141 = ssub.s32 640, 640
      %142 = vsyncadd [#allocation4], %s141
      %s143 = sshll.u32 [#allocation7], 4
      %s144 = int_to_ptr.vmem [resolvable:$true] %s143
      %149 = dma.vmem_to_hbm [thread:$0]  %s144, 640, %s2, [#allocation4], 128, 128, 8
    $region29: #{tpu_custom_call.1} parent=1 // pred_fallthru
      _
    // Predicated region
    $region30: #{tpu_custom_call.1} parent=1 // pred_check
      _
    $region31: #{tpu_custom_call.1} parent=1 // pred_check_branch
      %151 = sbr.rel (0) target = $region33
    $region32: #{tpu_custom_call.1} parent=1 // pred_region
      %152 = dma.done [#allocation4], 640
    $region33: #{tpu_custom_call.1} parent=1 // pred_fallthru
      _
    %153 = vsyncpa [#allocation3], 1
    %154 = vsyncpa [#allocation6], 1
    %155 = vsyncpa [#allocation4], 1

</llo_original>
